<compile_context>
chip_gen: v6e
topology: v6e:2x2x1
jax: 0.10.0
libtpu: 0.0.40
codegen_flags: <defaults>
</compile_context>

<pallas_src>
import functools

import jax
import jax.numpy as jnp
import numpy as np
from jax import lax
from jax.experimental import pallas as pl
from jax.experimental.pallas import tpu as pltpu


def _attn_kernel(x_ref, wkv_ref, bkv_ref, wqf_ref, bqf_ref, wf1_ref, o_ref,
                 k_scr, v_scr, *, n_valid, exp_dtype):
    """Per-grid-step body (one batch, one query tile).

    x_ref   : (C, N)        f32   activations (channels on sublanes, spatial on lanes)
    wkv_ref : (cq_pad+C, C) bf16  fused [Wk; Wv]
    bkv_ref : (cq_pad+C, 1) f32   fused [bk; bv]
    wqf_ref : (cq_pad+C, C) bf16  fused [Wq/sqrt(dk); Wf2]
    bqf_ref : (cq_pad+C, 1) f32   fused [bq/sqrt(dk); bf]
    wf1_ref : (C, C)        bf16  gamma * Wf1 (acts on the attention output)
    o_ref   : (C, tq)       f32   output tile
    k_scr   : (cq_pad, N)   bf16  keys for the whole image (scratch)
    v_scr   : (C, N)        bf16  values for the whole image (scratch)
    """
    cq_pad, n_pad = k_scr.shape
    tq = o_ref.shape[-1]
    qi = pl.program_id(1)

    # Once per batch: project k, v for ALL spatial positions into VMEM scratch.
    @pl.when(qi == 0)
    def _():
        xb = x_ref[...].astype(jnp.bfloat16)                         # (C, N)
        h = lax.dot_general(wkv_ref[...], xb, (((1,), (0,)), ((), ())),
                            preferred_element_type=jnp.float32)      # (cq_pad+C, N)
        h = h + bkv_ref[...]
        k_scr[...] = h[:cq_pad].astype(jnp.bfloat16)
        v_scr[...] = h[cq_pad:].astype(jnp.bfloat16)

    # Per query tile: q and the x-branch of fusion_conv (Wf2 @ x + bf).
    q0 = pl.multiple_of(qi * tq, 128)
    xq = x_ref[:, pl.ds(q0, tq)].astype(jnp.bfloat16)                 # (C, tq)
    hq = lax.dot_general(wqf_ref[...], xq, (((1,), (0,)), ((), ())),
                         preferred_element_type=jnp.float32)          # (cq_pad+C, tq)
    hq = hq + bqf_ref[...]
    q = hq[:cq_pad].astype(jnp.bfloat16)                              # (cq_pad, tq)
    xf = hq[cq_pad:]                                                  # (C, tq) f32

    # Key-major logits: logitsT[j, i] = <k[:, j], q[:, i]>  (1/sqrt(d_k) already
    # folded into Wq/bq; zero-padded q/k rows contribute nothing).
    logitsT = lax.dot_general(k_scr[...], q, (((0,), (0,)), ((), ())),
                              preferred_element_type=jnp.float32)     # (N, tq)
    if n_valid < n_pad:                      # static branch: mask padded keys
        key_idx = lax.broadcasted_iota(jnp.int32, (n_pad, tq), 0)
        logitsT = jnp.where(key_idx < n_valid, logitsT, jnp.float32(-1e30))

    # Softmax over keys (axis 0 = sublanes -> cheap cross-vreg accumulation).
    m = jnp.max(logitsT, axis=0, keepdims=True)                       # (1, tq)
    p = jnp.exp((logitsT - m).astype(exp_dtype))                      # (N, tq)
    s = jnp.sum(p.astype(jnp.float32), axis=0, keepdims=True)         # (1, tq) f32

    # out[c, i] = sum_j v[c, j] * softmax[j, i]   (canonical (C,N)x(N,tq) matmul)
    out_cq = lax.dot_general(v_scr[...], p.astype(jnp.bfloat16),
                             (((1,), (0,)), ((), ())),
                             preferred_element_type=jnp.float32)      # (C, tq)
    # Fold the softmax denominator into the small output (EUP reciprocal).
    out_cq = out_cq * pl.reciprocal(s, approx=True)

    # y = (gamma * Wf1) @ out + (Wf2 @ x + bf)
    y = lax.dot_general(wf1_ref[...], out_cq.astype(jnp.bfloat16),
                        (((1,), (0,)), ((), ())),
                        preferred_element_type=jnp.float32) + xf      # (C, tq)
    o_ref[...] = y                                                    # lane-dense store


def _round_up(x, m):
    return ((x + m - 1) // m) * m


def _exp_dtype_for_device():
    # bf16 EUP exists on v6e / v7x only; keep f32 exp on older generations.
    try:
        kind = jax.devices()[0].device_kind.lower()
    except Exception:
        return jnp.float32
    return jnp.bfloat16 if ("v6" in kind or "v7" in kind) else jnp.float32


def _pick_q_tile(n_pad, budget_bytes=24 << 20):
    # ~10 B live per logits element (f32 logitsT + p copy + slack).
    for tq in (512, 256, 128):
        if n_pad % tq == 0 and n_pad * tq * 10 <= budget_bytes:
            return tq
    return 128


def bottleneck_attention(x_nchw, params, *, q_tile=None):
    """x_nchw: (B, C, H, W) float32. Returns (B, C, H, W) float32."""
    B, C, H, W = x_nchw.shape
    assert C % 8 == 0 and C >= 8, "in_channels must be a positive multiple of 8"
    N = H * W
    n_pad = _round_up(N, 128)
    Cq = C // 8
    cq_pad = _round_up(Cq, 16)                 # bf16 packing granularity

    wq, bq, wk, bk, wv, bv, wf, bf, gamma = params
    scale = jnp.float32(1.0 / np.sqrt(np.float32(Cq)))

    # Zero-padded q/k rows (zero weight + zero bias -> no effect on q^T k).
    wq_p = jnp.zeros((cq_pad, C), jnp.float32).at[:Cq].set(wq * scale)
    bq_p = jnp.zeros((cq_pad,), jnp.float32).at[:Cq].set(bq * scale)
    wk_p = jnp.zeros((cq_pad, C), jnp.float32).at[:Cq].set(wk)
    bk_p = jnp.zeros((cq_pad,), jnp.float32).at[:Cq].set(bk)

    # Fused projection weights: [Wk; Wv] applied once per batch, [Wq; Wf2] per tile.
    w_kv = jnp.concatenate([wk_p, wv], axis=0).astype(jnp.bfloat16)        # (cq_pad+C, C)
    b_kv = jnp.concatenate([bk_p, bv], axis=0).reshape(-1, 1)              # f32
    w_qf = jnp.concatenate([wq_p, wf[:, C:]], axis=0).astype(jnp.bfloat16) # (cq_pad+C, C)
    b_qf = jnp.concatenate([bq_p, bf], axis=0).reshape(-1, 1)              # f32
    wf1_g = (gamma * wf[:, :C]).astype(jnp.bfloat16)                       # (C, C)
    r_kv, r_qf = w_kv.shape[0], w_qf.shape[0]

    # NCHW -> (B, C, N): pure reshape; pad N up to a multiple of 128 (lane-dense).
    x_bcn = x_nchw.reshape(B, C, N)
    if n_pad != N:
        x_bcn = jnp.pad(x_bcn, ((0, 0), (0, 0), (0, n_pad - N)))

    tq = q_tile if q_tile is not None else _pick_q_tile(n_pad)
    assert n_pad % tq == 0 and tq % 128 == 0
    nq = n_pad // tq

    # VMEM footprint: double-buffered x/out blocks + k/v scratch + logits tile + weights.
    est = (2 * C * n_pad * 4 + 2 * C * tq * 4
           + (cq_pad + C) * n_pad * 2
           + n_pad * tq * 10
           + (r_kv + r_qf) * (C * 2 + 4) + C * C * 2 + (1 << 20))
    vmem_limit = int(min(max(2 * est, 32 << 20), 48 << 20))

    kernel = functools.partial(_attn_kernel, n_valid=N,
                               exp_dtype=_exp_dtype_for_device())

    out_bcn = pl.pallas_call(
        kernel,
        out_shape=jax.ShapeDtypeStruct((B, C, n_pad), jnp.float32),
        grid=(B, nq),
        in_specs=[
            pl.BlockSpec((None, C, n_pad), lambda b, qi: (b, 0, 0)),   # x (f32)
            pl.BlockSpec((r_kv, C), lambda b, qi: (0, 0)),             # [Wk; Wv]
            pl.BlockSpec((r_kv, 1), lambda b, qi: (0, 0)),             # [bk; bv]
            pl.BlockSpec((r_qf, C), lambda b, qi: (0, 0)),             # [Wq/sqrt(dk); Wf2]
            pl.BlockSpec((r_qf, 1), lambda b, qi: (0, 0)),             # [bq/sqrt(dk); bf]
            pl.BlockSpec((C, C), lambda b, qi: (0, 0)),                # gamma*Wf1
        ],
        out_specs=pl.BlockSpec((None, C, tq), lambda b, qi: (b, 0, qi)),
        scratch_shapes=[
            pltpu.VMEM((cq_pad, n_pad), jnp.bfloat16),                 # keys
            pltpu.VMEM((C, n_pad), jnp.bfloat16),                      # values
        ],
        compiler_params=pltpu.CompilerParams(
            dimension_semantics=("parallel", "arbitrary"),
            vmem_limit_bytes=vmem_limit),
    )(x_bcn, w_kv, b_kv, w_qf, b_qf, wf1_g)

    if n_pad != N:
        out_bcn = out_bcn[:, :, :N]
    return out_bcn.reshape(B, C, H, W)


def reference(x, params):
    """Pure-JAX f32 replica of the PyTorch forward (NCHW)."""
    wq, bq, wk, bk, wv, bv, wf, bf, gamma = params
    B, C, H, W = x.shape
    N = H * W
    xf = x.reshape(B, C, N)                                   # (B, C, N)

    def conv1x1(w, b):
        return jnp.einsum('oc,bcn->bon', w, xf) + b[None, :, None]

    q = jnp.transpose(conv1x1(wq, bq), (0, 2, 1))             # (B, N, Cq)
    k = conv1x1(wk, bk)                                       # (B, Cq, N)
    v = conv1x1(wv, bv)                                       # (B, C, N)
    d_k = q.shape[-1]
    attn = jnp.einsum('bnd,bdm->bnm', q, k) / jnp.sqrt(jnp.float32(d_k))
    attn = jax.nn.softmax(attn, axis=-1)                      # (B, N, N)
    out = jnp.einsum('bcn,bmn->bcm', v, attn)                 # (B, C, N)
    out = gamma * out
    cat = jnp.concatenate([out, xf], axis=1)                  # (B, 2C, N)
    y = jnp.einsum('oc,bcn->bon', wf, cat) + bf[None, :, None]
    return y.reshape(B, C, H, W)


def init_params(key, C):
    Cq = C // 8
    ks = jax.random.split(key, 8)
    s = 0.1
    wq = s * jax.random.normal(ks[0], (Cq, C), jnp.float32)
    bq = s * jax.random.normal(ks[1], (Cq,), jnp.float32)
    wk = s * jax.random.normal(ks[2], (Cq, C), jnp.float32)
    bk = s * jax.random.normal(ks[3], (Cq,), jnp.float32)
    wv = s * jax.random.normal(ks[4], (C, C), jnp.float32)
    bv = s * jax.random.normal(ks[5], (C,), jnp.float32)
    wf = s * jax.random.normal(ks[6], (C, 2 * C), jnp.float32)
    bf = s * jax.random.normal(ks[7], (C,), jnp.float32)
    gamma = jnp.float32(0.01)
    return (wq, bq, wk, bk, wv, bv, wf, bf, gamma)


if __name__ == "__main__":
    key = jax.random.PRNGKey(0)
    kx, kp, kx2 = jax.random.split(key, 3)

    # Primary check: C multiple of 8, N = 256 lanes, two query tiles per batch
    # (exercises the k/v scratch reuse across query tiles).
    B, C, H, W = 2, 16, 16, 16
    x = jax.random.normal(kx, (B, C, H, W), jnp.float32)
    params = init_params(kp, C)

    out = jax.block_until_ready(bottleneck_attention(x, params, q_tile=128))
    ref = jax.block_until_ready(reference(x, params))
    # bf16 MXU inputs + bf16 exp (v6e/v7x) + approx reciprocal -> loosened tolerance.
    np.testing.assert_allclose(np.asarray(out), np.asarray(ref), rtol=2e-2, atol=2e-2)

    # Ragged-N path: 12x12 = 144 spatial positions padded to 256 lanes, padded
    # keys masked out of the softmax.
    x2 = jax.random.normal(kx2, (B, C, 12, 12), jnp.float32)
    out2 = jax.block_until_ready(bottleneck_attention(x2, params))
    ref2 = jax.block_until_ready(reference(x2, params))
    np.testing.assert_allclose(np.asarray(out2), np.asarray(ref2), rtol=2e-2, atol=2e-2)

    print("KERNEL_OK")
</pallas_src>

<mosaic_0001>
module attributes {stable_mosaic.version = 11 : i64} {
  func.func @_attn_kernel(%arg0: i32, %arg1: i32, %arg2: memref<1x16x256xf32, #tpu.memory_space<vmem>>, %arg3: memref<32x16xbf16, #tpu.memory_space<vmem>>, %arg4: memref<32x1xf32, #tpu.memory_space<vmem>>, %arg5: memref<32x16xbf16, #tpu.memory_space<vmem>>, %arg6: memref<32x1xf32, #tpu.memory_space<vmem>>, %arg7: memref<16x16xbf16, #tpu.memory_space<vmem>>, %arg8: memref<1x16x128xf32, #tpu.memory_space<vmem>>, %arg9: memref<16x256xbf16, #tpu.memory_space<vmem>>, %arg10: memref<16x256xbf16, #tpu.memory_space<vmem>>) attributes {dimension_semantics = [#tpu.dimension_semantics<parallel>, #tpu.dimension_semantics<arbitrary>], iteration_bounds = array<i64: 2, 2>, scalar_prefetch = 0 : i64, scratch_operands = 2 : i64, tpu.core_type = #tpu.core_type<tc>, window_params = [{transform_indices = @transform_0, window_bounds = array<i64: 1, 16, 256>}, {pipeline_mode = #tpu.pipeline_mode<synchronous>, transform_indices = @transform_1, window_bounds = array<i64: 32, 16>}, {pipeline_mode = #tpu.pipeline_mode<synchronous>, transform_indices = @transform_2, window_bounds = array<i64: 32, 1>}, {pipeline_mode = #tpu.pipeline_mode<synchronous>, transform_indices = @transform_3, window_bounds = array<i64: 32, 16>}, {pipeline_mode = #tpu.pipeline_mode<synchronous>, transform_indices = @transform_4, window_bounds = array<i64: 32, 1>}, {pipeline_mode = #tpu.pipeline_mode<synchronous>, transform_indices = @transform_5, window_bounds = array<i64: 16, 16>}, {transform_indices = @transform_6, window_bounds = array<i64: 1, 16, 128>}]} {
    %c0_i32 = arith.constant 0 : i32
    %0 = arith.cmpi eq, %arg1, %c0_i32 : i32
    %1 = arith.extui %0 : i1 to i32
    %c0_i32_0 = arith.constant 0 : i32
    %2 = arith.cmpi ne, %1, %c0_i32_0 : i32
    scf.if %2 {
      %c0_20 = arith.constant 0 : index
      %c0_21 = arith.constant 0 : index
      %c0_22 = arith.constant 0 : index
      %39 = vector.load %arg2[%c0_20, %c0_21, %c0_22] : memref<1x16x256xf32, #tpu.memory_space<vmem>>, vector<1x16x256xf32>
      %40 = vector.shape_cast %39 : vector<1x16x256xf32> to vector<16x256xf32>
      %41 = arith.truncf %40 : vector<16x256xf32> to vector<16x256xbf16>
      %c0_23 = arith.constant 0 : index
      %c0_24 = arith.constant 0 : index
      %42 = vector.load %arg3[%c0_23, %c0_24] : memref<32x16xbf16, #tpu.memory_space<vmem>>, vector<32x16xbf16>
      %cst_25 = arith.constant dense<0.000000e+00> : vector<32x256xf32>
      %43 = tpu.matmul %42, %41, %cst_25 {dimension_numbers = #tpu.dot_dimension_numbers<[1], [0], [0], [1], [0, 0, 1, 1], [], []>} : vector<32x16xbf16>, vector<16x256xbf16>, vector<32x256xf32> -> vector<32x256xf32>
      %c0_26 = arith.constant 0 : index
      %c0_27 = arith.constant 0 : index
      %44 = vector.load %arg4[%c0_26, %c0_27] : memref<32x1xf32, #tpu.memory_space<vmem>>, vector<32x1xf32>
      %45 = vector.broadcast %44 : vector<32x1xf32> to vector<32x256xf32>
      %46 = arith.addf %43, %45 : vector<32x256xf32>
      %47 = vector.extract_strided_slice %46 {offsets = [0, 0], sizes = [16, 256], strides = [1, 1]} : vector<32x256xf32> to vector<16x256xf32>
      %48 = arith.truncf %47 : vector<16x256xf32> to vector<16x256xbf16>
      %c0_28 = arith.constant 0 : index
      %c0_29 = arith.constant 0 : index
      %49 = vector.load %arg9[%c0_28, %c0_29] : memref<16x256xbf16, #tpu.memory_space<vmem>>, vector<16x256xbf16>
      tpu.vector_store %arg9[%c0_28, %c0_29], %48 {strides = array<i32>} : memref<16x256xbf16, #tpu.memory_space<vmem>>, vector<16x256xbf16>,
      %50 = vector.extract_strided_slice %46 {offsets = [16, 0], sizes = [16, 256], strides = [1, 1]} : vector<32x256xf32> to vector<16x256xf32>
      %51 = arith.truncf %50 : vector<16x256xf32> to vector<16x256xbf16>
      %c0_30 = arith.constant 0 : index
      %c0_31 = arith.constant 0 : index
      %52 = vector.load %arg10[%c0_30, %c0_31] : memref<16x256xbf16, #tpu.memory_space<vmem>>, vector<16x256xbf16>
      tpu.vector_store %arg10[%c0_30, %c0_31], %51 {strides = array<i32>} : memref<16x256xbf16, #tpu.memory_space<vmem>>, vector<16x256xbf16>,
    } else {
    }
    %c128_i32 = arith.constant 128 : i32
    %3 = arith.muli %arg1, %c128_i32 : i32
    %4 = tpu.assume_multiple %3, 128 : i32
    %c0 = arith.constant 0 : index
    %c0_1 = arith.constant 0 : index
    %5 = arith.index_cast %4 : i32 to index
    %6 = vector.load %arg2[%c0, %c0_1, %5] : memref<1x16x256xf32, #tpu.memory_space<vmem>>, vector<1x16x128xf32>
    %7 = vector.shape_cast %6 : vector<1x16x128xf32> to vector<16x128xf32>
    %8 = arith.truncf %7 : vector<16x128xf32> to vector<16x128xbf16>
    %c0_2 = arith.constant 0 : index
    %c0_3 = arith.constant 0 : index
    %9 = vector.load %arg5[%c0_2, %c0_3] : memref<32x16xbf16, #tpu.memory_space<vmem>>, vector<32x16xbf16>
    %cst = arith.constant dense<0.000000e+00> : vector<32x128xf32>
    %10 = tpu.matmul %9, %8, %cst {dimension_numbers = #tpu.dot_dimension_numbers<[1], [0], [0], [1], [0, 0, 1, 1], [], []>} : vector<32x16xbf16>, vector<16x128xbf16>, vector<32x128xf32> -> vector<32x128xf32>
    %c0_4 = arith.constant 0 : index
    %c0_5 = arith.constant 0 : index
    %11 = vector.load %arg6[%c0_4, %c0_5] : memref<32x1xf32, #tpu.memory_space<vmem>>, vector<32x1xf32>
    %12 = vector.broadcast %11 : vector<32x1xf32> to vector<32x128xf32>
    %13 = arith.addf %10, %12 : vector<32x128xf32>
    %14 = vector.extract_strided_slice %13 {offsets = [0, 0], sizes = [16, 128], strides = [1, 1]} : vector<32x128xf32> to vector<16x128xf32>
    %15 = arith.truncf %14 : vector<16x128xf32> to vector<16x128xbf16>
    %16 = vector.extract_strided_slice %13 {offsets = [16, 0], sizes = [16, 128], strides = [1, 1]} : vector<32x128xf32> to vector<16x128xf32>
    %c0_6 = arith.constant 0 : index
    %c0_7 = arith.constant 0 : index
    %17 = vector.load %arg9[%c0_6, %c0_7] : memref<16x256xbf16, #tpu.memory_space<vmem>>, vector<16x256xbf16>
    %cst_8 = arith.constant dense<0.000000e+00> : vector<256x128xf32>
    %18 = tpu.matmul %17, %15, %cst_8 {dimension_numbers = #tpu.dot_dimension_numbers<[0], [0], [1], [1], [0, 1, 1, 1], [], []>} : vector<16x256xbf16>, vector<16x128xbf16>, vector<256x128xf32> -> vector<256x128xf32>
    %cst_9 = arith.constant dense<0xFF800000> : vector<128xf32>
    %19 = vector.multi_reduction <maximumf>, %18, %cst_9 [0] : vector<256x128xf32> to vector<128xf32>
    %20 = vector.shape_cast %19 : vector<128xf32> to vector<1x128xf32>
    %21 = vector.broadcast %20 : vector<1x128xf32> to vector<256x128xf32>
    %22 = arith.subf %18, %21 : vector<256x128xf32>
    %23 = math.exp %22 : vector<256x128xf32>
    %cst_10 = arith.constant dense<0.000000e+00> : vector<128xf32>
    %24 = vector.multi_reduction <add>, %23, %cst_10 [0] : vector<256x128xf32> to vector<128xf32>
    %25 = vector.shape_cast %24 : vector<128xf32> to vector<1x128xf32>
    %c0_11 = arith.constant 0 : index
    %c0_12 = arith.constant 0 : index
    %26 = vector.load %arg10[%c0_11, %c0_12] : memref<16x256xbf16, #tpu.memory_space<vmem>>, vector<16x256xbf16>
    %27 = arith.truncf %23 : vector<256x128xf32> to vector<256x128xbf16>
    %cst_13 = arith.constant dense<0.000000e+00> : vector<16x128xf32>
    %28 = tpu.matmul %26, %27, %cst_13 {dimension_numbers = #tpu.dot_dimension_numbers<[1], [0], [0], [1], [0, 0, 1, 1], [], []>} : vector<16x256xbf16>, vector<256x128xbf16>, vector<16x128xf32> -> vector<16x128xf32>
    %29 = tpu.reciprocal %25 {approx = true} : vector<1x128xf32> -> vector<1x128xf32>
    %30 = vector.broadcast %29 : vector<1x128xf32> to vector<16x128xf32>
    %31 = arith.mulf %28, %30 : vector<16x128xf32>
    %c0_14 = arith.constant 0 : index
    %c0_15 = arith.constant 0 : index
    %32 = vector.load %arg7[%c0_14, %c0_15] : memref<16x16xbf16, #tpu.memory_space<vmem>>, vector<16x16xbf16>
    %33 = arith.truncf %31 : vector<16x128xf32> to vector<16x128xbf16>
    %cst_16 = arith.constant dense<0.000000e+00> : vector<16x128xf32>
    %34 = tpu.matmul %32, %33, %cst_16 {dimension_numbers = #tpu.dot_dimension_numbers<[1], [0], [0], [1], [0, 0, 1, 1], [], []>} : vector<16x16xbf16>, vector<16x128xbf16>, vector<16x128xf32> -> vector<16x128xf32>
    %35 = arith.addf %34, %16 : vector<16x128xf32>
    %c0_17 = arith.constant 0 : index
    %c0_18 = arith.constant 0 : index
    %c0_19 = arith.constant 0 : index
    %36 = vector.load %arg8[%c0_17, %c0_18, %c0_19] : memref<1x16x128xf32, #tpu.memory_space<vmem>>, vector<1x16x128xf32>
    %37 = vector.shape_cast %36 : vector<1x16x128xf32> to vector<16x128xf32>
    %38 = vector.shape_cast %35 : vector<16x128xf32> to vector<1x16x128xf32>
    tpu.vector_store %arg8[%c0_17, %c0_18, %c0_19], %38 {strides = array<i32>} : memref<1x16x128xf32, #tpu.memory_space<vmem>>, vector<1x16x128xf32>,
    return
  }
  func.func @transform_0(%arg0: i32, %arg1: i32) -> (i32, i32, i32) {
    %c0_i32 = arith.constant 0 : i32
    %c0_i32_0 = arith.constant 0 : i32
    %c0_i32_1 = arith.constant 0 : i32
    return %arg0, %c0_i32, %c0_i32_0 : i32, i32, i32
  }
  func.func @transform_1(%arg0: i32, %arg1: i32) -> (i32, i32) {
    %c0_i32 = arith.constant 0 : i32
    %c0_i32_0 = arith.constant 0 : i32
    %c0_i32_1 = arith.constant 0 : i32
    return %c0_i32, %c0_i32_0 : i32, i32
  }
  func.func @transform_2(%arg0: i32, %arg1: i32) -> (i32, i32) {
    %c0_i32 = arith.constant 0 : i32
    %c0_i32_0 = arith.constant 0 : i32
    %c0_i32_1 = arith.constant 0 : i32
    return %c0_i32, %c0_i32_0 : i32, i32
  }
  func.func @transform_3(%arg0: i32, %arg1: i32) -> (i32, i32) {
    %c0_i32 = arith.constant 0 : i32
    %c0_i32_0 = arith.constant 0 : i32
    %c0_i32_1 = arith.constant 0 : i32
    return %c0_i32, %c0_i32_0 : i32, i32
  }
  func.func @transform_4(%arg0: i32, %arg1: i32) -> (i32, i32) {
    %c0_i32 = arith.constant 0 : i32
    %c0_i32_0 = arith.constant 0 : i32
    %c0_i32_1 = arith.constant 0 : i32
    return %c0_i32, %c0_i32_0 : i32, i32
  }
  func.func @transform_5(%arg0: i32, %arg1: i32) -> (i32, i32) {
    %c0_i32 = arith.constant 0 : i32
    %c0_i32_0 = arith.constant 0 : i32
    %c0_i32_1 = arith.constant 0 : i32
    return %c0_i32, %c0_i32_0 : i32, i32
  }
  func.func @transform_6(%arg0: i32, %arg1: i32) -> (i32, i32, i32) {
    %c0_i32 = arith.constant 0 : i32
    %c0_i32_0 = arith.constant 0 : i32
    return %arg0, %c0_i32, %arg1 : i32, i32, i32
  }
}

</mosaic_0001>

<llo_original>
// kernel: tpu_custom_call.1
$region0: #{tpu_custom_call.1}
  #allocation0 [shape = 'u32[]', space=smem, size = 0x4, offset = 0x4, fixed_abs, tag = 'smem constant byte address 0x4 - core index']
  #allocation1 [shape = 'u32[144,128]{1,0:T(1,128)}', space=vmem, size = 0x12000, scoped, tag = 'internal scratch']
  #allocation2 [shape = 'bf16[16,256]{1,0:T(8,128)(2,1)}', space=vmem, size = 0x2000, scoped, tag = 'scratch operand']
  #allocation3 [shape = 'bf16[16,256]{1,0:T(8,128)(2,1)}', space=vmem, size = 0x2000, scoped, tag = 'scratch operand']
  %s0 = inlined_call_operand.vmem [shape: f32[2,16,256], index: 0, kind: input, shape index: {}]
  %s1 = inlined_call_operand.vmem [shape: bf16[32,16], index: 1, kind: input, shape index: {}]
  %s2 = inlined_call_operand.vmem [shape: f32[32,1], index: 2, kind: input, shape index: {}]
  %s3 = inlined_call_operand.vmem [shape: bf16[32,16], index: 3, kind: input, shape index: {}]
  %s4 = inlined_call_operand.vmem [shape: f32[32,1], index: 4, kind: input, shape index: {}]
  %s5 = inlined_call_operand.vmem [shape: bf16[16,16], index: 5, kind: input, shape index: {}]
  %s6 = inlined_call_operand.hbm [shape: f32[2,16,256], index: 6, kind: output, shape index: {}]
  %s7 = sld [smem:[#allocation0]]
  $region61: #{tpu_custom_call.1} parent=0
    _
  %s9 = ssub.s32 1, %s7
  %s10 = scalar_select 0, %s9, %s7
  $region1: #{tpu_custom_call.1} parent=0
    #allocation4 [shape = 'u8[16384]{0}', space=vmem, size = 0x4000, scoped, tag = 'output window, operand 0']
    #allocation5 [shape = 's32[2]{0}', space=sflag, size = 0x8, scoped, tag = 'scoped memory for tpu_custom_call.1']
    %11 = vsyncpa [#allocation5], 0
    %s12 = scalar_lea.sflag [#allocation5], 1
    %13 = vsyncpa %s12, 0
    loop: start=0, step=1, limit=6
    $region2: #{tpu_custom_call.1} parent=1 // loop_pre_header
      _
    $region3: #{tpu_custom_call.1} parent=1 // loop_header
      %s15 = sphi 0, %s19
      %p16 = scmp.ge.s32.totalorder %s15, 6
      %s22 = sphi 0, %s34
      %s23 = sphi 0, %s30
      %s24 = sphi 0, %s22
      %s25 = sphi 0, %s23
      %s26 = sphi 0, %s24
      %s27 = sphi 0, %s25
      %s37 = sphi 0, %s39
      %s40 = sphi 0, %s37
      %s41 = sphi 0, %s40
      %s57 = sphi 0, %s41
      %s61 = sphi 0, %s61
      %s63 = sphi 0, %s61
      %s64 = sphi 0, %s63
      %s78 = sphi 0, %s64
      %s82 = sphi 0, %s82
      %s84 = sphi 0, %s82
      %s85 = sphi 0, %s84
      %s99 = sphi 0, %s85
      %s103 = sphi 0, %s103
      %s105 = sphi 0, %s103
      %s106 = sphi 0, %s105
      %s120 = sphi 0, %s106
      %s124 = sphi 0, %s124
      %s126 = sphi 0, %s124
      %s127 = sphi 0, %s126
      %s141 = sphi 0, %s127
      %s145 = sphi 0, %s145
      %s147 = sphi 0, %s145
      %s148 = sphi 0, %s147
      %s162 = sphi 0, %s148
      %s170 = sphi 0, %s172
      %s173 = sphi 0, %s170
      %s174 = sphi 0, %s173
      %s190 = sphi 0, %s174
    $region4: #{tpu_custom_call.1} parent=1 // loop_header_branch
      %18 = sbr.rel (%p16) target = $region8
    $region5: #{tpu_custom_call.1} parent=1 // loop_body
      %s20 = ssub.s32 %s15, 1
      %s21 = ssub.s32 %s15, 2
      %s28 = sadd.s32 1, %s23
      %p29 = scmp.ge.s32.totalorder %s28, 2
      %s30 = scalar_select %p29, 0, %s28
      %s31 = sadd.s32 1, %s22
      %s32 = scalar_select %p29, %s31, %s22
      %p33 = scmp.ge.s32.totalorder %s32, 2
      %s34 = scalar_select %p33, 0, %s32
      %s35 = ssub.s32 %s22, %s34
      %p36 = scmp.eq.s32.totalorder %s35, 0
      %s38 = sadd.s32 %s37, 1
      %s39 = scalar_select %p36, %s37, %s38
      %p42 = pneg %p36
      %p43 = scmp.eq.s32.totalorder %s15, 3
      %p44 = por %p42, %p43
      %p45 = scmp.ne.s32.totalorder %s37, %s40
      %p46 = scmp.eq.s32.totalorder %s15, 0
      %p47 = por %p45, %p46
      %p48 = scmp.ne.s32.totalorder %s37, %s40
      %p49 = scmp.eq.s32.totalorder %s20, 3
      %p50 = por %p48, %p49
      %p51 = scmp.ne.s32.totalorder %s40, %s41
      %p52 = scmp.eq.s32.totalorder %s20, 0
      %p53 = por %p51, %p52
      %p54 = scmp.ne.s32.totalorder %s40, %s41
      %p55 = scmp.eq.s32.totalorder %s21, 3
      %p56 = por %p54, %p55
      %p58 = scmp.ne.s32.totalorder %s41, %s57
      %p59 = scmp.eq.s32.totalorder %s21, 0
      %p60 = por %p58, %p59
      %s62 = sadd.s32 %s61, 1
      %p65 = scmp.eq.s32.totalorder %s15, 3
      %p66 = scmp.ne.s32.totalorder %s61, %s63
      %p67 = scmp.eq.s32.totalorder %s15, 0
      %p68 = por %p66, %p67
      %p69 = scmp.ne.s32.totalorder %s61, %s63
      %p70 = scmp.eq.s32.totalorder %s20, 3
      %p71 = por %p69, %p70
      %p72 = scmp.ne.s32.totalorder %s63, %s64
      %p73 = scmp.eq.s32.totalorder %s20, 0
      %p74 = por %p72, %p73
      %p75 = scmp.ne.s32.totalorder %s63, %s64
      %p76 = scmp.eq.s32.totalorder %s21, 3
      %p77 = por %p75, %p76
      %p79 = scmp.ne.s32.totalorder %s64, %s78
      %p80 = scmp.eq.s32.totalorder %s21, 0
      %p81 = por %p79, %p80
      %s83 = sadd.s32 %s82, 1
      %p86 = scmp.eq.s32.totalorder %s15, 3
      %p87 = scmp.ne.s32.totalorder %s82, %s84
      %p88 = scmp.eq.s32.totalorder %s15, 0
      %p89 = por %p87, %p88
      %p90 = scmp.ne.s32.totalorder %s82, %s84
      %p91 = scmp.eq.s32.totalorder %s20, 3
      %p92 = por %p90, %p91
      %p93 = scmp.ne.s32.totalorder %s84, %s85
      %p94 = scmp.eq.s32.totalorder %s20, 0
      %p95 = por %p93, %p94
      %p96 = scmp.ne.s32.totalorder %s84, %s85
      %p97 = scmp.eq.s32.totalorder %s21, 3
      %p98 = por %p96, %p97
      %p100 = scmp.ne.s32.totalorder %s85, %s99
      %p101 = scmp.eq.s32.totalorder %s21, 0
      %p102 = por %p100, %p101
      %s104 = sadd.s32 %s103, 1
      %p107 = scmp.eq.s32.totalorder %s15, 3
      %p108 = scmp.ne.s32.totalorder %s103, %s105
      %p109 = scmp.eq.s32.totalorder %s15, 0
      %p110 = por %p108, %p109
      %p111 = scmp.ne.s32.totalorder %s103, %s105
      %p112 = scmp.eq.s32.totalorder %s20, 3
      %p113 = por %p111, %p112
      %p114 = scmp.ne.s32.totalorder %s105, %s106
      %p115 = scmp.eq.s32.totalorder %s20, 0
      %p116 = por %p114, %p115
      %p117 = scmp.ne.s32.totalorder %s105, %s106
      %p118 = scmp.eq.s32.totalorder %s21, 3
      %p119 = por %p117, %p118
      %p121 = scmp.ne.s32.totalorder %s106, %s120
      %p122 = scmp.eq.s32.totalorder %s21, 0
      %p123 = por %p121, %p122
      %s125 = sadd.s32 %s124, 1
      %p128 = scmp.eq.s32.totalorder %s15, 3
      %p129 = scmp.ne.s32.totalorder %s124, %s126
      %p130 = scmp.eq.s32.totalorder %s15, 0
      %p131 = por %p129, %p130
      %p132 = scmp.ne.s32.totalorder %s124, %s126
      %p133 = scmp.eq.s32.totalorder %s20, 3
      %p134 = por %p132, %p133
      %p135 = scmp.ne.s32.totalorder %s126, %s127
      %p136 = scmp.eq.s32.totalorder %s20, 0
      %p137 = por %p135, %p136
      %p138 = scmp.ne.s32.totalorder %s126, %s127
      %p139 = scmp.eq.s32.totalorder %s21, 3
      %p140 = por %p138, %p139
      %p142 = scmp.ne.s32.totalorder %s127, %s141
      %p143 = scmp.eq.s32.totalorder %s21, 0
      %p144 = por %p142, %p143
      %s146 = sadd.s32 %s145, 1
      %p149 = scmp.eq.s32.totalorder %s15, 3
      %p150 = scmp.ne.s32.totalorder %s145, %s147
      %p151 = scmp.eq.s32.totalorder %s15, 0
      %p152 = por %p150, %p151
      %p153 = scmp.ne.s32.totalorder %s145, %s147
      %p154 = scmp.eq.s32.totalorder %s20, 3
      %p155 = por %p153, %p154
      %p156 = scmp.ne.s32.totalorder %s147, %s148
      %p157 = scmp.eq.s32.totalorder %s20, 0
      %p158 = por %p156, %p157
      %p159 = scmp.ne.s32.totalorder %s147, %s148
      %p160 = scmp.eq.s32.totalorder %s21, 3
      %p161 = por %p159, %p160
      %p163 = scmp.ne.s32.totalorder %s148, %s162
      %p164 = scmp.eq.s32.totalorder %s21, 0
      %p165 = por %p163, %p164
      %s166 = ssub.s32 %s22, %s34
      %s167 = ssub.s32 %s23, %s30
      %s168 = sor.u32 %s166, %s167
      %p169 = scmp.eq.s32.totalorder %s168, 0
      %s171 = sadd.s32 %s170, 1
      %s172 = scalar_select %p169, %s170, %s171
      %p175 = pneg %p169
      %p176 = scmp.eq.s32.totalorder %s15, 3
      %p177 = por %p175, %p176
      %p178 = scmp.ne.s32.totalorder %s170, %s173
      %p179 = scmp.eq.s32.totalorder %s15, 0
      %p180 = por %p178, %p179
      %p181 = scmp.ne.s32.totalorder %s170, %s173
      %p182 = scmp.eq.s32.totalorder %s20, 3
      %p183 = por %p181, %p182
      %p184 = scmp.ne.s32.totalorder %s173, %s174
      %p185 = scmp.eq.s32.totalorder %s20, 0
      %p186 = por %p184, %p185
      %p187 = scmp.ne.s32.totalorder %s173, %s174
      %p188 = scmp.eq.s32.totalorder %s21, 3
      %p189 = por %p187, %p188
      %p191 = scmp.ne.s32.totalorder %s174, %s190
      %p192 = scmp.eq.s32.totalorder %s21, 0
      %p193 = por %p191, %p192
      %p194 = scmp.le.s32.totalorder 1, %s15
      %p195 = scmp.lt.s32.totalorder %s15, 5
      %p196 = pnand %p194, %p195
      %p197 = pneg %p196
      // Predicated region
      $region9: #{tpu_custom_call.1} parent=5 // pred_check
        _
      $region10: #{tpu_custom_call.1} parent=5 // pred_check_branch
        %199 = sbr.rel (%p196) target = $region12
      $region11: #{tpu_custom_call.1} parent=5 // pred_region
        %s200 = ssub.s32 %s15, 1
        // Predicated region
        $region13: #{tpu_custom_call.1} parent=11 // pred_check
          %p201 = pneg %p74
        $region14: #{tpu_custom_call.1} parent=11 // pred_check_branch
          %203 = sbr.rel (%p201) target = $region16
        $region15: #{tpu_custom_call.1} parent=11 // pred_region
          _
        $region16: #{tpu_custom_call.1} parent=11 // pred_fallthru
          _
        // Predicated region
        $region17: #{tpu_custom_call.1} parent=11 // pred_check
          %p204 = pneg %p95
        $region18: #{tpu_custom_call.1} parent=11 // pred_check_branch
          %206 = sbr.rel (%p204) target = $region20
        $region19: #{tpu_custom_call.1} parent=11 // pred_region
          _
        $region20: #{tpu_custom_call.1} parent=11 // pred_fallthru
          _
        // Predicated region
        $region21: #{tpu_custom_call.1} parent=11 // pred_check
          %p207 = pneg %p116
        $region22: #{tpu_custom_call.1} parent=11 // pred_check_branch
          %209 = sbr.rel (%p207) target = $region24
        $region23: #{tpu_custom_call.1} parent=11 // pred_region
          _
        $region24: #{tpu_custom_call.1} parent=11 // pred_fallthru
          _
        // Predicated region
        $region25: #{tpu_custom_call.1} parent=11 // pred_check
          %p210 = pneg %p137
        $region26: #{tpu_custom_call.1} parent=11 // pred_check_branch
          %212 = sbr.rel (%p210) target = $region28
        $region27: #{tpu_custom_call.1} parent=11 // pred_region
          _
        $region28: #{tpu_custom_call.1} parent=11 // pred_fallthru
          _
        // Predicated region
        $region29: #{tpu_custom_call.1} parent=11 // pred_check
          %p213 = pneg %p158
        $region30: #{tpu_custom_call.1} parent=11 // pred_check_branch
          %215 = sbr.rel (%p213) target = $region32
        $region31: #{tpu_custom_call.1} parent=11 // pred_region
          _
        $region32: #{tpu_custom_call.1} parent=11 // pred_fallthru
          _
      $region12: #{tpu_custom_call.1} parent=5 // pred_fallthru
        _
      %p216 = scmp.lt.s32.totalorder %s15, 4
      // Predicated region
      $region33: #{tpu_custom_call.1} parent=5 // pred_check
        %p217 = pneg %p216
      $region34: #{tpu_custom_call.1} parent=5 // pred_check_branch
        %219 = sbr.rel (%p217) target = $region36
      $region35: #{tpu_custom_call.1} parent=5 // pred_region
        // Predicated region
        $region37: #{tpu_custom_call.1} parent=35 // pred_check
          %p220 = pneg %p47
        $region38: #{tpu_custom_call.1} parent=35 // pred_check_branch
          %222 = sbr.rel (%p220) target = $region40
        $region39: #{tpu_custom_call.1} parent=35 // pred_region
          %p223 = scmp.lt.s32.totalorder %s22, 1
          %s224 = scalar_select %p223, %s22, 1
          %s225 = smul.addr %s224, 4
          %s226 = smul.addr %s225, 8
          %s227 = scalar_lea.vmem %s0, %s226
        $region40: #{tpu_custom_call.1} parent=35 // pred_fallthru
          _
      $region36: #{tpu_custom_call.1} parent=5 // pred_fallthru
        _
      %p228 = scmp.le.s32.totalorder 1, %s15
      %p229 = scmp.lt.s32.totalorder %s15, 5
      %p230 = pnand %p228, %p229
      %p231 = pneg %p230
      // Predicated region
      $region41: #{tpu_custom_call.1} parent=5 // pred_check
        _
      $region42: #{tpu_custom_call.1} parent=5 // pred_check_branch
        %233 = sbr.rel (%p230) target = $region44
      $region43: #{tpu_custom_call.1} parent=5 // pred_region
        %s234 = ssub.s32 %s15, 1
        %p235 = scmp.lt.s32.totalorder %s24, 1
        %s236 = scalar_select %p235, %s24, 1
        %s237 = smul.addr %s236, 4
        %s238 = smul.addr %s237, 8
        %s239 = scalar_lea.vmem %s0, %s238
        %p240 = pneg %p53
        %p241 = pneg %p50
        %p242 = pneg %p74
        %p243 = pneg %p71
        %p244 = pneg %p95
        %p245 = pneg %p92
        %p246 = pneg %p116
        %p247 = pneg %p113
        %p248 = pneg %p137
        %p249 = pneg %p134
        %p250 = pneg %p158
        %p251 = pneg %p155
        %p252 = pneg %p186
        %p253 = pneg %p183
        %s254 = sand.u32 %s173, 1
        %s255 = scalar_lea.sflag [#allocation5], %s254
        %s256 = sand.u32 %s173, 1
        %s257 = smul.addr %s256, 16
        %s258 = scalar_lea.vmem [#allocation4], %s257
        %p259 = scmp.lt.s32.totalorder %s24, 1
        %s260 = scalar_select %p259, %s24, 1
        %s261 = smul.addr %s260, 4
        %s262 = smul.addr %s261, 8
        %s263 = scalar_lea.vmem %s0, %s262
        %p265 = scmp.eq.s32.totalorder %s25, 0
        // Predicated region
        $region45: #{tpu_custom_call.1} parent=43 // pred_check
          %p266 = pneg %p265
        $region46: #{tpu_custom_call.1} parent=43 // pred_check_branch
          %268 = sbr.rel (%p266) target = $region48
        $region47: #{tpu_custom_call.1} parent=43 // pred_region
          %v269 = vld [vmem:[%s263] sm:$0xff]
          %v270 = vld [vmem:[%s263 + $0x8] sm:$0xff]
          %v271 = vld [vmem:[%s263 + $0x10] sm:$0xff]
          %v272 = vld [vmem:[%s263 + $0x18] sm:$0xff]
          %v273 = vpack.c.bf16 %v271, %v269
          %v274 = vpack.c.bf16 %v272, %v270
          %v275 = vld [vmem:[%s1] sm:$0xf]
          %v276 = vld [vmem:[%s1 + $0x4] sm:$0xf]
          %v277 = vld [vmem:[%s1 + $0x8] sm:$0xf]
          %v278 = vld [vmem:[%s1 + $0xc] sm:$0xf]
          %v279 = vld [vmem:[%s2] sm:$0xff]
          %v280 = vld [vmem:[%s2 + $0x8] sm:$0xff]
          %v281 = vld [vmem:[%s2 + $0x10] sm:$0xff]
          %v282 = vld [vmem:[%s2 + $0x18] sm:$0xff]
          %284 = vset.pattern.permute.xlu0 0
          %285 = vperm.xlu0 %284, %v279
          %v286 = vpop.permute.xlu0 %285
          %289 = vset.pattern.permute.xlu0 0
          %290 = vperm.xlu0 %289, %v280
          %v291 = vpop.permute.xlu0 %290
          %294 = vset.pattern.permute.xlu0 0
          %295 = vperm.xlu0 %294, %v281
          %v296 = vpop.permute.xlu0 %295
          %299 = vset.pattern.permute.xlu0 0
          %300 = vperm.xlu0 %299, %v282
          %v301 = vpop.permute.xlu0 %300
          %v307 = vunpack.c.l.b16 %v275
          %v308 = vunpack.c.l.b16 %v276
          %v309 = vunpack.c.l.b16 %v277
          %v310 = vunpack.c.l.b16 %v278
          %v311 = vpack.c.b16 %v308, %v307
          %v312 = vpack.c.b16 %v310, %v309
          %vm313 = vcmask 130048
          %v315 = vsel %vm313, %v311, 0
          %v318 = vsel %vm313, %v312, 0
          %320 = vmatprep.subr.bf16.mxu0 0
          %321 = vmatpush1.bf16.msra.mxu0 0
          %322 = vmatprep.subr.bf16.mxu0 0
          %323 = vmatpush1.bf16.msra.mxu0 0
          %324 = vmatprep.subr.bf16.mxu0 0
          %325 = vmatpush1.bf16.msra.mxu0 0
          %326 = vmatprep.subr.bf16.mxu0 0
          %327 = vmatpush1.bf16.msra.mxu0 0
          %328 = vmatprep.subr.bf16.mxu0 0
          %329 = vmatpush1.bf16.msra.mxu0 0
          %330 = vmatprep.subr.bf16.mxu0 0
          %331 = vmatpush1.bf16.msra.mxu0 0
          %332 = vmatprep.subr.bf16.mxu0 0
          %333 = vmatpush1.bf16.msra.mxu0 0
          %334 = vmatprep.subr.bf16.mxu0 %v274
          %335 = vmatpush1.bf16.msra.mxu0 %v273
          %336 = vmatprep.subr.bf16.mxu0 0
          %337 = vmatpush2.bf16.msra.mxu0 0
          %338 = vmatprep.subr.bf16.mxu0 0
          %339 = vmatpush2.bf16.msra.mxu0 0
          %340 = vmatprep.subr.bf16.mxu0 0
          %341 = vmatpush2.bf16.msra.mxu0 0
          %342 = vmatprep.subr.bf16.mxu0 0
          %343 = vmatpush2.bf16.msra.mxu0 0
          %344 = vmatprep.subr.bf16.mxu0 0
          %345 = vmatpush2.bf16.msra.mxu0 0
          %346 = vmatprep.subr.bf16.mxu0 0
          %347 = vmatpush2.bf16.msra.mxu0 0
          %348 = vmatprep.subr.bf16.mxu0 0
          %349 = vmatpush2.bf16.msra.mxu0 0
          %350 = vmatprep.subr.bf16.mxu0 0
          %351 = vmatpush2.bf16.msra.mxu0 0
          %352 = vmatprep.mubr.bf16.mxu0 0
          %353 = vmatmul.mubr.bf16.gmra.mxu0 %v315
          %v354 = vpop.f32.mrf.mxu0
          %v355 = vadd.f32 %v286, %v354
          %v356 = vpop.f32.mrf.mxu0
          %v357 = vadd.f32 %v286, %v356
          %v358 = vpop.f32.mrf.mxu0
          %v359 = vadd.f32 %v291, %v358
          %v360 = vpop.f32.mrf.mxu0
          %v361 = vadd.f32 %v291, %v360
          %362 = vmatprep.mubr.bf16.mxu0 0
          %363 = vmatmul.mubr.bf16.gmra.mxu0 %v318
          %v364 = vpop.f32.mrf.mxu0
          %v365 = vadd.f32 %v296, %v364
          %v366 = vpop.f32.mrf.mxu0
          %v367 = vadd.f32 %v296, %v366
          %v368 = vpop.f32.mrf.mxu0
          %v369 = vadd.f32 %v301, %v368
          %v370 = vpop.f32.mrf.mxu0
          %v371 = vadd.f32 %v301, %v370
          %372 = vdwg.mxu0
          %v373 = vpack.c.bf16 %v359, %v355
          %v374 = vpack.c.bf16 %v361, %v357
          %v377 = vunpack.c.l.b16 %v373
          %v378 = vunpack.c.l.b16 %v374
          %v379 = vunpack.c.h.b16 %v373
          %v380 = vunpack.c.h.b16 %v374
          %v381 = vpack.c.b16 %v378, %v377
          %v382 = vpack.c.b16 %v380, %v379
          %385 = vst [vmem:[#allocation2] sm:$0xff] %v381
          %386 = vst [vmem:[#allocation2 + $0x8] sm:$0xff] %v382
          %v387 = vpack.c.bf16 %v369, %v365
          %v388 = vpack.c.bf16 %v371, %v367
          %v391 = vunpack.c.l.b16 %v387
          %v392 = vunpack.c.l.b16 %v388
          %v393 = vunpack.c.h.b16 %v387
          %v394 = vunpack.c.h.b16 %v388
          %v395 = vpack.c.b16 %v392, %v391
          %v396 = vpack.c.b16 %v394, %v393
          %399 = vst [vmem:[#allocation3] sm:$0xff] %v395
          %400 = vst [vmem:[#allocation3 + $0x8] sm:$0xff] %v396
        $region48: #{tpu_custom_call.1} parent=43 // pred_fallthru
          _
        %s401 = smul.u32 %s25, 128
        %s402 = sshra.s32 %s401, 7
        %s403 = sand.u32 %s401, 127
        %s404 = smul.addr %s402, 8
        %s405 = scalar_lea.vmem %s263, %s404
        %v406 = vld [vmem:[%s405] sm:$0xff]
        %v407 = vld [vmem:[%s405 + $0x10] sm:$0xff]
        %v408 = vpack.c.bf16 %v407, %v406
        %v409 = vld [vmem:[%s3] sm:$0xf]
        %v410 = vld [vmem:[%s3 + $0x4] sm:$0xf]
        %v411 = vld [vmem:[%s3 + $0x8] sm:$0xf]
        %v412 = vld [vmem:[%s3 + $0xc] sm:$0xf]
        %v413 = vld [vmem:[%s4] sm:$0xff]
        %v414 = vld [vmem:[%s4 + $0x8] sm:$0xff]
        %v415 = vld [vmem:[%s4 + $0x10] sm:$0xff]
        %v416 = vld [vmem:[%s4 + $0x18] sm:$0xff]
        %418 = vset.pattern.permute.xlu0 0
        %419 = vperm.xlu0 %418, %v413
        %v420 = vpop.permute.xlu0 %419
        %423 = vset.pattern.permute.xlu0 0
        %424 = vperm.xlu0 %423, %v414
        %v425 = vpop.permute.xlu0 %424
        %428 = vset.pattern.permute.xlu0 0
        %429 = vperm.xlu0 %428, %v415
        %v430 = vpop.permute.xlu0 %429
        %433 = vset.pattern.permute.xlu0 0
        %434 = vperm.xlu0 %433, %v416
        %v435 = vpop.permute.xlu0 %434
        %v441 = vunpack.c.l.b16 %v409
        %v442 = vunpack.c.l.b16 %v410
        %v443 = vunpack.c.l.b16 %v411
        %v444 = vunpack.c.l.b16 %v412
        %v445 = vpack.c.b16 %v442, %v441
        %v446 = vpack.c.b16 %v444, %v443
        %vm447 = vcmask 130048
        %v449 = vsel %vm447, %v445, 0
        %v452 = vsel %vm447, %v446, 0
        %454 = vmatprep.subr.bf16.mxu0 0
        %455 = vmatpush1.bf16.msra.mxu0 0
        %456 = vmatprep.subr.bf16.mxu0 0
        %457 = vmatpush1.bf16.msra.mxu0 0
        %458 = vmatprep.subr.bf16.mxu0 0
        %459 = vmatpush1.bf16.msra.mxu0 0
        %460 = vmatprep.subr.bf16.mxu0 0
        %461 = vmatpush1.bf16.msra.mxu0 0
        %462 = vmatprep.subr.bf16.mxu0 0
        %463 = vmatpush1.bf16.msra.mxu0 0
        %464 = vmatprep.subr.bf16.mxu0 0
        %465 = vmatpush1.bf16.msra.mxu0 0
        %466 = vmatprep.subr.bf16.mxu0 0
        %467 = vmatpush1.bf16.msra.mxu0 0
        %468 = vmatprep.subr.bf16.mxu0 0
        %469 = vmatpush1.bf16.msra.mxu0 %v408
        %470 = vmatprep.subr.bf16.mxu0 0
        %471 = vmatpush2.bf16.msra.mxu0 0
        %472 = vmatprep.subr.bf16.mxu0 0
        %473 = vmatpush2.bf16.msra.mxu0 0
        %474 = vmatprep.subr.bf16.mxu0 0
        %475 = vmatpush2.bf16.msra.mxu0 0
        %476 = vmatprep.subr.bf16.mxu0 0
        %477 = vmatpush2.bf16.msra.mxu0 0
        %478 = vmatprep.subr.bf16.mxu0 0
        %479 = vmatpush2.bf16.msra.mxu0 0
        %480 = vmatprep.subr.bf16.mxu0 0
        %481 = vmatpush2.bf16.msra.mxu0 0
        %482 = vmatprep.subr.bf16.mxu0 0
        %483 = vmatpush2.bf16.msra.mxu0 0
        %484 = vmatprep.subr.bf16.mxu0 0
        %485 = vmatpush2.bf16.msra.mxu0 0
        %486 = vmatprep.mubr.bf16.mxu0 0
        %487 = vmatmul.mubr.bf16.gmra.mxu0 %v449
        %v488 = vpop.f32.mrf.mxu0
        %v489 = vadd.f32 %v420, %v488
        %v490 = vpop.f32.mrf.mxu0
        %v491 = vpop.f32.mrf.mxu0
        %v492 = vadd.f32 %v425, %v491
        %v493 = vpop.f32.mrf.mxu0
        %494 = vmatprep.mubr.bf16.mxu0 0
        %495 = vmatmul.mubr.bf16.gmra.mxu0 %v452
        %v496 = vpop.f32.mrf.mxu0
        %v497 = vadd.f32 %v430, %v496
        %v498 = vpop.f32.mrf.mxu0
        %v499 = vpop.f32.mrf.mxu0
        %v500 = vadd.f32 %v435, %v499
        %v501 = vpop.f32.mrf.mxu0
        %502 = vdwg.mxu0
        %v503 = vpack.c.bf16 %v492, %v489
        %v504 = vld [vmem:[#allocation2] sm:$0xff]
        %v505 = vld [vmem:[#allocation2 + $0x8] sm:$0xff]
        %v508 = vunpack.c.l.b16 %v504
        %v509 = vunpack.c.h.b16 %v504
        %v510 = vunpack.c.l.b16 %v505
        %v511 = vunpack.c.h.b16 %v505
        %v512 = vpack.c.b16 %v510, %v508
        %v513 = vpack.c.b16 %v511, %v509
        %516 = vxpose.xlu0.c.b16.start [1/8] %v512, 128
        %517 = vxpose.xlu0.c.b16.cont [2/8] 0, 128
        %518 = vxpose.xlu0.c.b16.cont [3/8] 0, 128
        %519 = vxpose.xlu0.c.b16.cont [4/8] 0, 128
        %520 = vxpose.xlu0.c.b16.cont [5/8] 0, 128
        %521 = vxpose.xlu0.c.b16.cont [6/8] 0, 128
        %522 = vxpose.xlu0.c.b16.cont [7/8] 0, 128
        %523 = vxpose.xlu0.c.b16.end [8/8] 0, 128
        %v524 = vpop.trf.xlu0
        %v525 = vpop.trf.xlu0
        %v526 = vpop.trf.xlu0
        %v527 = vpop.trf.xlu0
        %v528 = vpop.trf.xlu0
        %v529 = vpop.trf.xlu0
        %v530 = vpop.trf.xlu0
        %v531 = vpop.trf.xlu0
        %532 = vxpose.xlu0.c.b16.start [1/8] %v513, 128
        %533 = vxpose.xlu0.c.b16.cont [2/8] 0, 128
        %534 = vxpose.xlu0.c.b16.cont [3/8] 0, 128
        %535 = vxpose.xlu0.c.b16.cont [4/8] 0, 128
        %536 = vxpose.xlu0.c.b16.cont [5/8] 0, 128
        %537 = vxpose.xlu0.c.b16.cont [6/8] 0, 128
        %538 = vxpose.xlu0.c.b16.cont [7/8] 0, 128
        %539 = vxpose.xlu0.c.b16.end [8/8] 0, 128
        %v540 = vpop.trf.xlu0
        %v541 = vpop.trf.xlu0
        %v542 = vpop.trf.xlu0
        %v543 = vpop.trf.xlu0
        %v544 = vpop.trf.xlu0
        %v545 = vpop.trf.xlu0
        %v546 = vpop.trf.xlu0
        %v547 = vpop.trf.xlu0
        %v549 = vsel %vm447, %v524, 0
        %v552 = vsel %vm447, %v525, 0
        %v555 = vsel %vm447, %v526, 0
        %v558 = vsel %vm447, %v527, 0
        %v561 = vsel %vm447, %v528, 0
        %v564 = vsel %vm447, %v529, 0
        %v567 = vsel %vm447, %v530, 0
        %v570 = vsel %vm447, %v531, 0
        %v573 = vsel %vm447, %v540, 0
        %v576 = vsel %vm447, %v541, 0
        %v579 = vsel %vm447, %v542, 0
        %v582 = vsel %vm447, %v543, 0
        %v585 = vsel %vm447, %v544, 0
        %v588 = vsel %vm447, %v545, 0
        %v591 = vsel %vm447, %v546, 0
        %v594 = vsel %vm447, %v547, 0
        %596 = vmatprep.subr.bf16.mxu0 0
        %597 = vmatpush1.bf16.msra.mxu0 0
        %598 = vmatprep.subr.bf16.mxu0 0
        %599 = vmatpush1.bf16.msra.mxu0 0
        %600 = vmatprep.subr.bf16.mxu0 0
        %601 = vmatpush1.bf16.msra.mxu0 0
        %602 = vmatprep.subr.bf16.mxu0 0
        %603 = vmatpush1.bf16.msra.mxu0 0
        %604 = vmatprep.subr.bf16.mxu0 0
        %605 = vmatpush1.bf16.msra.mxu0 0
        %606 = vmatprep.subr.bf16.mxu0 0
        %607 = vmatpush1.bf16.msra.mxu0 0
        %608 = vmatprep.subr.bf16.mxu0 0
        %609 = vmatpush1.bf16.msra.mxu0 0
        %610 = vmatprep.subr.bf16.mxu0 0
        %611 = vmatpush1.bf16.msra.mxu0 %v503
        %612 = vmatprep.subr.bf16.mxu0 0
        %613 = vmatpush2.bf16.msra.mxu0 0
        %614 = vmatprep.subr.bf16.mxu0 0
        %615 = vmatpush2.bf16.msra.mxu0 0
        %616 = vmatprep.subr.bf16.mxu0 0
        %617 = vmatpush2.bf16.msra.mxu0 0
        %618 = vmatprep.subr.bf16.mxu0 0
        %619 = vmatpush2.bf16.msra.mxu0 0
        %620 = vmatprep.subr.bf16.mxu0 0
        %621 = vmatpush2.bf16.msra.mxu0 0
        %622 = vmatprep.subr.bf16.mxu0 0
        %623 = vmatpush2.bf16.msra.mxu0 0
        %624 = vmatprep.subr.bf16.mxu0 0
        %625 = vmatpush2.bf16.msra.mxu0 0
        %626 = vmatprep.subr.bf16.mxu0 0
        %627 = vmatpush2.bf16.msra.mxu0 0
        %628 = vmatprep.mubr.bf16.mxu0 0
        %629 = vmatmul.mubr.bf16.gmra.mxu0 %v549
        %v630 = vpop.f32.mrf.mxu0
        %v631 = vadd.f32 0.0, %v630
        %v632 = vpop.f32.mrf.mxu0
        %v633 = vpop.f32.mrf.mxu0
        %v634 = vadd.f32 0.0, %v633
        %v635 = vpop.f32.mrf.mxu0
        %636 = vmatprep.mubr.bf16.mxu0 0
        %637 = vmatmul.mubr.bf16.gmra.mxu0 %v552
        %v638 = vpop.f32.mrf.mxu0
        %v639 = vadd.f32 0.0, %v638
        %v640 = vpop.f32.mrf.mxu0
        %v641 = vpop.f32.mrf.mxu0
        %v642 = vadd.f32 0.0, %v641
        %v643 = vpop.f32.mrf.mxu0
        %644 = vmatprep.mubr.bf16.mxu0 0
        %645 = vmatmul.mubr.bf16.gmra.mxu0 %v555
        %v646 = vpop.f32.mrf.mxu0
        %v647 = vadd.f32 0.0, %v646
        %v648 = vpop.f32.mrf.mxu0
        %v649 = vpop.f32.mrf.mxu0
        %v650 = vadd.f32 0.0, %v649
        %v651 = vpop.f32.mrf.mxu0
        %652 = vmatprep.mubr.bf16.mxu0 0
        %653 = vmatmul.mubr.bf16.gmra.mxu0 %v558
        %v654 = vpop.f32.mrf.mxu0
        %v655 = vadd.f32 0.0, %v654
        %v656 = vpop.f32.mrf.mxu0
        %v657 = vpop.f32.mrf.mxu0
        %v658 = vadd.f32 0.0, %v657
        %v659 = vpop.f32.mrf.mxu0
        %660 = vmatprep.mubr.bf16.mxu0 0
        %661 = vmatmul.mubr.bf16.gmra.mxu0 %v561
        %v662 = vpop.f32.mrf.mxu0
        %v663 = vadd.f32 0.0, %v662
        %v664 = vpop.f32.mrf.mxu0
        %v665 = vpop.f32.mrf.mxu0
        %v666 = vadd.f32 0.0, %v665
        %v667 = vpop.f32.mrf.mxu0
        %668 = vmatprep.mubr.bf16.mxu0 0
        %669 = vmatmul.mubr.bf16.gmra.mxu0 %v564
        %v670 = vpop.f32.mrf.mxu0
        %v671 = vadd.f32 0.0, %v670
        %v672 = vpop.f32.mrf.mxu0
        %v673 = vpop.f32.mrf.mxu0
        %v674 = vadd.f32 0.0, %v673
        %v675 = vpop.f32.mrf.mxu0
        %676 = vmatprep.mubr.bf16.mxu0 0
        %677 = vmatmul.mubr.bf16.gmra.mxu0 %v567
        %v678 = vpop.f32.mrf.mxu0
        %v679 = vadd.f32 0.0, %v678
        %v680 = vpop.f32.mrf.mxu0
        %v681 = vpop.f32.mrf.mxu0
        %v682 = vadd.f32 0.0, %v681
        %v683 = vpop.f32.mrf.mxu0
        %684 = vmatprep.mubr.bf16.mxu0 0
        %685 = vmatmul.mubr.bf16.gmra.mxu0 %v570
        %v686 = vpop.f32.mrf.mxu0
        %v687 = vadd.f32 0.0, %v686
        %v688 = vpop.f32.mrf.mxu0
        %v689 = vpop.f32.mrf.mxu0
        %v690 = vadd.f32 0.0, %v689
        %v691 = vpop.f32.mrf.mxu0
        %692 = vmatprep.mubr.bf16.mxu0 0
        %693 = vmatmul.mubr.bf16.gmra.mxu0 %v573
        %v694 = vpop.f32.mrf.mxu0
        %v695 = vadd.f32 0.0, %v694
        %v696 = vpop.f32.mrf.mxu0
        %v697 = vpop.f32.mrf.mxu0
        %v698 = vadd.f32 0.0, %v697
        %v699 = vpop.f32.mrf.mxu0
        %700 = vmatprep.mubr.bf16.mxu0 0
        %701 = vmatmul.mubr.bf16.gmra.mxu0 %v576
        %v702 = vpop.f32.mrf.mxu0
        %v703 = vadd.f32 0.0, %v702
        %v704 = vpop.f32.mrf.mxu0
        %v705 = vpop.f32.mrf.mxu0
        %v706 = vadd.f32 0.0, %v705
        %v707 = vpop.f32.mrf.mxu0
        %708 = vmatprep.mubr.bf16.mxu0 0
        %709 = vmatmul.mubr.bf16.gmra.mxu0 %v579
        %v710 = vpop.f32.mrf.mxu0
        %v711 = vadd.f32 0.0, %v710
        %v712 = vpop.f32.mrf.mxu0
        %v713 = vpop.f32.mrf.mxu0
        %v714 = vadd.f32 0.0, %v713
        %v715 = vpop.f32.mrf.mxu0
        %716 = vmatprep.mubr.bf16.mxu0 0
        %717 = vmatmul.mubr.bf16.gmra.mxu0 %v582
        %v718 = vpop.f32.mrf.mxu0
        %v719 = vadd.f32 0.0, %v718
        %v720 = vpop.f32.mrf.mxu0
        %v721 = vpop.f32.mrf.mxu0
        %v722 = vadd.f32 0.0, %v721
        %v723 = vpop.f32.mrf.mxu0
        %724 = vmatprep.mubr.bf16.mxu0 0
        %725 = vmatmul.mubr.bf16.gmra.mxu0 %v585
        %v726 = vpop.f32.mrf.mxu0
        %v727 = vadd.f32 0.0, %v726
        %v728 = vpop.f32.mrf.mxu0
        %v729 = vpop.f32.mrf.mxu0
        %v730 = vadd.f32 0.0, %v729
        %v731 = vpop.f32.mrf.mxu0
        %732 = vmatprep.mubr.bf16.mxu0 0
        %733 = vmatmul.mubr.bf16.gmra.mxu0 %v588
        %v734 = vpop.f32.mrf.mxu0
        %v735 = vadd.f32 0.0, %v734
        %v736 = vpop.f32.mrf.mxu0
        %v737 = vpop.f32.mrf.mxu0
        %v738 = vadd.f32 0.0, %v737
        %v739 = vpop.f32.mrf.mxu0
        %740 = vmatprep.mubr.bf16.mxu0 0
        %741 = vmatmul.mubr.bf16.gmra.mxu0 %v591
        %v742 = vpop.f32.mrf.mxu0
        %v743 = vadd.f32 0.0, %v742
        %v744 = vpop.f32.mrf.mxu0
        %v745 = vpop.f32.mrf.mxu0
        %v746 = vadd.f32 0.0, %v745
        %v747 = vpop.f32.mrf.mxu0
        %748 = vmatprep.mubr.bf16.mxu0 0
        %749 = vmatmul.mubr.bf16.gmra.mxu0 %v594
        %v750 = vpop.f32.mrf.mxu0
        %v751 = vadd.f32 0.0, %v750
        %v752 = vpop.f32.mrf.mxu0
        %v753 = vpop.f32.mrf.mxu0
        %v754 = vadd.f32 0.0, %v753
        %v755 = vpop.f32.mrf.mxu0
        %756 = vdwg.mxu0
        %v757 = vmax.f32 %v631, %v647
        %v758 = vmax.f32 %v634, %v650
        %v759 = vmax.f32 %v639, %v655
        %v760 = vmax.f32 %v642, %v658
        %v761 = vmax.f32 %v757, %v663
        %v762 = vmax.f32 %v758, %v666
        %v763 = vmax.f32 %v759, %v671
        %v764 = vmax.f32 %v760, %v674
        %v765 = vmax.f32 %v761, %v679
        %v766 = vmax.f32 %v762, %v682
        %v767 = vmax.f32 %v763, %v687
        %v768 = vmax.f32 %v764, %v690
        %v769 = vmax.f32 %v765, %v695
        %v770 = vmax.f32 %v766, %v698
        %v771 = vmax.f32 %v767, %v703
        %v772 = vmax.f32 %v768, %v706
        %v773 = vmax.f32 %v769, %v711
        %v774 = vmax.f32 %v770, %v714
        %v775 = vmax.f32 %v771, %v719
        %v776 = vmax.f32 %v772, %v722
        %v777 = vmax.f32 %v773, %v727
        %v778 = vmax.f32 %v774, %v730
        %v779 = vmax.f32 %v775, %v735
        %v780 = vmax.f32 %v776, %v738
        %v781 = vmax.f32 %v777, %v743
        %v782 = vmax.f32 %v778, %v746
        %v783 = vmax.f32 %v779, %v751
        %v784 = vmax.f32 %v780, %v754
        %v785 = vmax.f32 %v781, %v782
        %v786 = vmax.f32 %v783, %v784
        %v787 = vmax.f32 %v785, %v786
        %v788 = vrot.slane %v787, 4
        %v789 = vmax.f32 %v787, %v788
        %v790 = vrot.slane %v789, 2
        %v791 = vmax.f32 %v789, %v790
        %v792 = vrot.slane %v791, 1
        %v793 = vmax.f32 %v791, %v792
        %v794 = vsub.f32 %v631, %v793
        %v795 = vsub.f32 %v634, %v793
        %v796 = vsub.f32 %v639, %v793
        %v797 = vsub.f32 %v642, %v793
        %v798 = vsub.f32 %v647, %v793
        %v799 = vsub.f32 %v650, %v793
        %v800 = vsub.f32 %v655, %v793
        %v801 = vsub.f32 %v658, %v793
        %v802 = vsub.f32 %v663, %v793
        %v803 = vsub.f32 %v666, %v793
        %v804 = vsub.f32 %v671, %v793
        %v805 = vsub.f32 %v674, %v793
        %v806 = vsub.f32 %v679, %v793
        %v807 = vsub.f32 %v682, %v793
        %v808 = vsub.f32 %v687, %v793
        %v809 = vsub.f32 %v690, %v793
        %v810 = vsub.f32 %v695, %v793
        %v811 = vsub.f32 %v698, %v793
        %v812 = vsub.f32 %v703, %v793
        %v813 = vsub.f32 %v706, %v793
        %v814 = vsub.f32 %v711, %v793
        %v815 = vsub.f32 %v714, %v793
        %v816 = vsub.f32 %v719, %v793
        %v817 = vsub.f32 %v722, %v793
        %v818 = vsub.f32 %v727, %v793
        %v819 = vsub.f32 %v730, %v793
        %v820 = vsub.f32 %v735, %v793
        %v821 = vsub.f32 %v738, %v793
        %v822 = vsub.f32 %v743, %v793
        %v823 = vsub.f32 %v746, %v793
        %v824 = vsub.f32 %v751, %v793
        %v825 = vsub.f32 %v754, %v793
        %v826 = vmul.f32 %v794, 1.442695
        %v827 = vpow.pop %v826
        %v828 = vmul.f32 %v795, 1.442695
        %v829 = vpow.pop %v828
        %v830 = vmul.f32 %v796, 1.442695
        %v831 = vpow.pop %v830
        %v832 = vmul.f32 %v797, 1.442695
        %v833 = vpow.pop %v832
        %v834 = vmul.f32 %v798, 1.442695
        %v835 = vpow.pop %v834
        %v836 = vmul.f32 %v799, 1.442695
        %v837 = vpow.pop %v836
        %v838 = vmul.f32 %v800, 1.442695
        %v839 = vpow.pop %v838
        %v840 = vmul.f32 %v801, 1.442695
        %v841 = vpow.pop %v840
        %v842 = vmul.f32 %v802, 1.442695
        %v843 = vpow.pop %v842
        %v844 = vmul.f32 %v803, 1.442695
        %v845 = vpow.pop %v844
        %v846 = vmul.f32 %v804, 1.442695
        %v847 = vpow.pop %v846
        %v848 = vmul.f32 %v805, 1.442695
        %v849 = vpow.pop %v848
        %v850 = vmul.f32 %v806, 1.442695
        %v851 = vpow.pop %v850
        %v852 = vmul.f32 %v807, 1.442695
        %v853 = vpow.pop %v852
        %v854 = vmul.f32 %v808, 1.442695
        %v855 = vpow.pop %v854
        %v856 = vmul.f32 %v809, 1.442695
        %v857 = vpow.pop %v856
        %v858 = vmul.f32 %v810, 1.442695
        %v859 = vpow.pop %v858
        %v860 = vmul.f32 %v811, 1.442695
        %v861 = vpow.pop %v860
        %v862 = vmul.f32 %v812, 1.442695
        %v863 = vpow.pop %v862
        %v864 = vmul.f32 %v813, 1.442695
        %v865 = vpow.pop %v864
        %v866 = vmul.f32 %v814, 1.442695
        %v867 = vpow.pop %v866
        %v868 = vmul.f32 %v815, 1.442695
        %v869 = vpow.pop %v868
        %v870 = vmul.f32 %v816, 1.442695
        %v871 = vpow.pop %v870
        %v872 = vmul.f32 %v817, 1.442695
        %v873 = vpow.pop %v872
        %v874 = vmul.f32 %v818, 1.442695
        %v875 = vpow.pop %v874
        %v876 = vmul.f32 %v819, 1.442695
        %v877 = vpow.pop %v876
        %v878 = vmul.f32 %v820, 1.442695
        %v879 = vpow.pop %v878
        %v880 = vmul.f32 %v821, 1.442695
        %v881 = vpow.pop %v880
        %v882 = vmul.f32 %v822, 1.442695
        %v883 = vpow.pop %v882
        %v884 = vmul.f32 %v823, 1.442695
        %v885 = vpow.pop %v884
        %v886 = vmul.f32 %v824, 1.442695
        %v887 = vpow.pop %v886
        %v888 = vmul.f32 %v825, 1.442695
        %v889 = vpow.pop %v888
        %v890 = vadd.f32 %v827, %v829
        %v891 = vadd.f32 %v890, %v831
        %v892 = vadd.f32 %v891, %v833
        %v893 = vadd.f32 %v892, %v835
        %v894 = vadd.f32 %v893, %v837
        %v895 = vadd.f32 %v894, %v839
        %v896 = vadd.f32 %v895, %v841
        %v897 = vadd.f32 %v896, %v843
        %v898 = vadd.f32 %v897, %v845
        %v899 = vadd.f32 %v898, %v847
        %v900 = vadd.f32 %v899, %v849
        %v901 = vadd.f32 %v900, %v851
        %v902 = vadd.f32 %v901, %v853
        %v903 = vadd.f32 %v902, %v855
        %v904 = vadd.f32 %v903, %v857
        %v905 = vadd.f32 %v904, %v859
        %v906 = vadd.f32 %v905, %v861
        %v907 = vadd.f32 %v906, %v863
        %v908 = vadd.f32 %v907, %v865
        %v909 = vadd.f32 %v908, %v867
        %v910 = vadd.f32 %v909, %v869
        %v911 = vadd.f32 %v910, %v871
        %v912 = vadd.f32 %v911, %v873
        %v913 = vadd.f32 %v912, %v875
        %v914 = vadd.f32 %v913, %v877
        %v915 = vadd.f32 %v914, %v879
        %v916 = vadd.f32 %v915, %v881
        %v917 = vadd.f32 %v916, %v883
        %v918 = vadd.f32 %v917, %v885
        %v919 = vadd.f32 %v918, %v887
        %v920 = vadd.f32 %v919, %v889
        %v921 = vrot.slane %v920, 4
        %v922 = vadd.f32 %v920, %v921
        %v923 = vrot.slane %v922, 2
        %v924 = vadd.f32 %v922, %v923
        %v925 = vrot.slane %v924, 1
        %v926 = vadd.f32 %v924, %v925
        %v927 = vld [vmem:[#allocation3] sm:$0xff]
        %v928 = vld [vmem:[#allocation3 + $0x8] sm:$0xff]
        %v929 = vpack.c.bf16 %v829, %v827
        %v930 = vpack.c.bf16 %v833, %v831
        %v931 = vpack.c.bf16 %v837, %v835
        %v932 = vpack.c.bf16 %v841, %v839
        %v933 = vpack.c.bf16 %v845, %v843
        %v934 = vpack.c.bf16 %v849, %v847
        %v935 = vpack.c.bf16 %v853, %v851
        %v936 = vpack.c.bf16 %v857, %v855
        %v937 = vpack.c.bf16 %v861, %v859
        %v938 = vpack.c.bf16 %v865, %v863
        %v939 = vpack.c.bf16 %v869, %v867
        %v940 = vpack.c.bf16 %v873, %v871
        %v941 = vpack.c.bf16 %v877, %v875
        %v942 = vpack.c.bf16 %v881, %v879
        %v943 = vpack.c.bf16 %v885, %v883
        %v944 = vpack.c.bf16 %v889, %v887
        %v947 = vunpack.c.l.b16 %v927
        %v948 = vunpack.c.h.b16 %v927
        %v949 = vunpack.c.l.b16 %v928
        %v950 = vunpack.c.h.b16 %v928
        %v951 = vpack.c.b16 %v949, %v947
        %v952 = vpack.c.b16 %v950, %v948
        %955 = vmatprep.subr.bf16.mxu0 0
        %956 = vmatpush1.bf16.msra.mxu0 %v936
        %957 = vmatprep.subr.bf16.mxu0 0
        %958 = vmatpush1.bf16.msra.mxu0 %v935
        %959 = vmatprep.subr.bf16.mxu0 0
        %960 = vmatpush1.bf16.msra.mxu0 %v934
        %961 = vmatprep.subr.bf16.mxu0 0
        %962 = vmatpush1.bf16.msra.mxu0 %v933
        %963 = vmatprep.subr.bf16.mxu0 0
        %964 = vmatpush1.bf16.msra.mxu0 %v932
        %965 = vmatprep.subr.bf16.mxu0 0
        %966 = vmatpush1.bf16.msra.mxu0 %v931
        %967 = vmatprep.subr.bf16.mxu0 0
        %968 = vmatpush1.bf16.msra.mxu0 %v930
        %969 = vmatprep.subr.bf16.mxu0 0
        %970 = vmatpush1.bf16.msra.mxu0 %v929
        %971 = vmatprep.subr.bf16.mxu0 0
        %972 = vmatpush2.bf16.msra.mxu0 %v944
        %973 = vmatprep.subr.bf16.mxu0 0
        %974 = vmatpush2.bf16.msra.mxu0 %v943
        %975 = vmatprep.subr.bf16.mxu0 0
        %976 = vmatpush2.bf16.msra.mxu0 %v942
        %977 = vmatprep.subr.bf16.mxu0 0
        %978 = vmatpush2.bf16.msra.mxu0 %v941
        %979 = vmatprep.subr.bf16.mxu0 0
        %980 = vmatpush2.bf16.msra.mxu0 %v940
        %981 = vmatprep.subr.bf16.mxu0 0
        %982 = vmatpush2.bf16.msra.mxu0 %v939
        %983 = vmatprep.subr.bf16.mxu0 0
        %984 = vmatpush2.bf16.msra.mxu0 %v938
        %985 = vmatprep.subr.bf16.mxu0 0
        %986 = vmatpush2.bf16.msra.mxu0 %v937
        %987 = vmatprep.mubr.bf16.mxu0 %v952
        %988 = vmatmul.mubr.bf16.gmra.mxu0 %v951
        %v989 = vpop.f32.mrf.mxu0
        %v990 = vadd.f32 0.0, %v989
        %v991 = vpop.f32.mrf.mxu0
        %v992 = vpop.f32.mrf.mxu0
        %v993 = vadd.f32 0.0, %v992
        %v994 = vpop.f32.mrf.mxu0
        %995 = vdwg.mxu0
        %v996 = vrcp.pop %v926
        %v997 = vmul.f32 %v990, %v996
        %v998 = vmul.f32 %v993, %v996
        %v999 = vld [vmem:[%s5] sm:$0xf]
        %v1000 = vld [vmem:[%s5 + $0x4] sm:$0xf]
        %v1001 = vpack.c.bf16 %v998, %v997
        %v1004 = vunpack.c.l.b16 %v999
        %v1005 = vunpack.c.l.b16 %v1000
        %v1006 = vpack.c.b16 %v1005, %v1004
        %v1008 = vsel %vm447, %v1006, 0
        %1010 = vmatprep.subr.bf16.mxu0 0
        %1011 = vmatpush1.bf16.msra.mxu0 0
        %1012 = vmatprep.subr.bf16.mxu0 0
        %1013 = vmatpush1.bf16.msra.mxu0 0
        %1014 = vmatprep.subr.bf16.mxu0 0
        %1015 = vmatpush1.bf16.msra.mxu0 0
        %1016 = vmatprep.subr.bf16.mxu0 0
        %1017 = vmatpush1.bf16.msra.mxu0 0
        %1018 = vmatprep.subr.bf16.mxu0 0
        %1019 = vmatpush1.bf16.msra.mxu0 0
        %1020 = vmatprep.subr.bf16.mxu0 0
        %1021 = vmatpush1.bf16.msra.mxu0 0
        %1022 = vmatprep.subr.bf16.mxu0 0
        %1023 = vmatpush1.bf16.msra.mxu0 0
        %1024 = vmatprep.subr.bf16.mxu0 0
        %1025 = vmatpush1.bf16.msra.mxu0 %v1001
        %1026 = vmatprep.subr.bf16.mxu0 0
        %1027 = vmatpush2.bf16.msra.mxu0 0
        %1028 = vmatprep.subr.bf16.mxu0 0
        %1029 = vmatpush2.bf16.msra.mxu0 0
        %1030 = vmatprep.subr.bf16.mxu0 0
        %1031 = vmatpush2.bf16.msra.mxu0 0
        %1032 = vmatprep.subr.bf16.mxu0 0
        %1033 = vmatpush2.bf16.msra.mxu0 0
        %1034 = vmatprep.subr.bf16.mxu0 0
        %1035 = vmatpush2.bf16.msra.mxu0 0
        %1036 = vmatprep.subr.bf16.mxu0 0
        %1037 = vmatpush2.bf16.msra.mxu0 0
        %1038 = vmatprep.subr.bf16.mxu0 0
        %1039 = vmatpush2.bf16.msra.mxu0 0
        %1040 = vmatprep.subr.bf16.mxu0 0
        %1041 = vmatpush2.bf16.msra.mxu0 0
        %1042 = vmatprep.mubr.bf16.mxu0 0
        %1043 = vmatmul.mubr.bf16.gmra.mxu0 %v1008
        %v1044 = vpop.f32.mrf.mxu0
        %v1045 = vadd.f32 %v497, %v1044
        %v1046 = vpop.f32.mrf.mxu0
        %v1047 = vpop.f32.mrf.mxu0
        %v1048 = vadd.f32 %v500, %v1047
        %v1049 = vpop.f32.mrf.mxu0
        %1050 = vdwg.mxu0
        %1051 = vst [vmem:[%s258] sm:$0xff] %v1045
        %1052 = vst [vmem:[%s258 + $0x8] sm:$0xff] %v1048
        %s1053 = sand.u32 %s173, 1
        %s1054 = scalar_lea.sflag [#allocation5], %s1053
        %s1055 = sand.u32 %s173, 1
        %s1056 = smul.addr %s1055, 16
        %s1057 = scalar_lea.vmem [#allocation4], %s1056
        // Predicated region
        $region49: #{tpu_custom_call.1} parent=43 // pred_check
          %p1058 = pneg %p183
        $region50: #{tpu_custom_call.1} parent=43 // pred_check_branch
          %1060 = sbr.rel (%p1058) target = $region52
        $region51: #{tpu_custom_call.1} parent=43 // pred_region
          %s1062 = ssub.s32 256, 256
          %1063 = vsyncadd %s1054, %s1062
          %s1064 = smul.addr %s24, 4
          %s1065 = sadd.s32 %s25, %s1064
          %s1066 = smul.addr %s1065, 128
          %s1067 = scalar_lea.hbm %s6, %s1066
          %s1068 = sshll.u32 %s1057, 4
          %s1069 = int_to_ptr.vmem [resolvable:$true] %s1068
          %1074 = dma.vmem_to_hbm [thread:$0]  %s1069, 256, %s1067, %s1054, 128, 256, 8
        $region52: #{tpu_custom_call.1} parent=43 // pred_fallthru
          _
      $region44: #{tpu_custom_call.1} parent=5 // pred_fallthru
        _
      %p1075 = scmp.le.s32.totalorder 2, %s15
      // Predicated region
      $region53: #{tpu_custom_call.1} parent=5 // pred_check
        %p1076 = pneg %p1075
      $region54: #{tpu_custom_call.1} parent=5 // pred_check_branch
        %1078 = sbr.rel (%p1076) target = $region56
      $region55: #{tpu_custom_call.1} parent=5 // pred_region
        %s1079 = ssub.s32 %s15, 2
        // Predicated region
        $region57: #{tpu_custom_call.1} parent=55 // pred_check
          %p1080 = pneg %p189
        $region58: #{tpu_custom_call.1} parent=55 // pred_check_branch
          %1082 = sbr.rel (%p1080) target = $region60
        $region59: #{tpu_custom_call.1} parent=55 // pred_region
          %s1083 = sand.u32 %s174, 1
          %s1084 = scalar_lea.sflag [#allocation5], %s1083
          %s1085 = sand.u32 %s174, 1
          %s1086 = smul.addr %s1085, 16
          %s1087 = scalar_lea.vmem [#allocation4], %s1086
          %1088 = dma.done %s1084, 256
        $region60: #{tpu_custom_call.1} parent=55 // pred_fallthru
          _
      $region56: #{tpu_custom_call.1} parent=5 // pred_fallthru
        _
    $region6: #{tpu_custom_call.1} parent=1 // loop_footer
      %s19 = sadd.s32 1, %s15
    $region7: #{tpu_custom_call.1} parent=1 // loop_footer_branch
      %14 = sbr.rel target = $region3
    $region8: #{tpu_custom_call.1} parent=1 // loop_exit
      _
    %1089 = vsyncpa [#allocation5], 1
    %s1090 = scalar_lea.sflag [#allocation5], 1
    %1091 = vsyncpa %s1090, 1

</llo_original>
